<compile_context>
chip_gen: v7x
topology: tpu7x:2x2x1
jax: 0.10.0
libtpu: 0.0.40
codegen_flags: <defaults>
</compile_context>

<pallas_src>
import jax
import jax.numpy as jnp
from jax.experimental import pallas as pl
from jax.experimental.pallas import tpu as pltpu

EPSILON = float(jnp.finfo(jnp.float32).eps)  # matches torch.finfo(torch.float32).eps

_LANE = 128     # vreg lane width: last-dim tiles must be 128-dense for unmasked stores
_SUBLANE = 8    # f32 sublane granularity


def _round_up(x, m):
    return (x + m - 1) // m * m


def _unsuper_kernel(reg_ref, y_ref, x_ref, w1t_ref, w2t_ref, o_ref):
    """One (TB, comp_pad) output tile.

    denom = y @ W1^T + l_2*y + l_1 + EPS ; numer = x @ W2^T ; out = (numer/denom) * y
    Matmuls run in the weights' dtype (f32 or bf16) with f32 accumulation; the
    elementwise epilogue is always f32 on the VPU; the reciprocal goes to the EUP.
    """
    y = y_ref[...]                       # (TB, CP) f32
    x = x_ref[...]                       # (TB, FP) f32
    mm_dtype = w1t_ref.dtype

    # Issue both MXU matmuls back-to-back so their pushes pipeline before any
    # elementwise consumer forces a drain.
    denom_mm = jnp.dot(y.astype(mm_dtype), w1t_ref[...],
                       preferred_element_type=jnp.float32)
    numer = jnp.dot(x.astype(mm_dtype), w2t_ref[...],
                    preferred_element_type=jnp.float32)

    l_1 = reg_ref[0]
    l_2 = reg_ref[1]
    denom = denom_mm + l_2 * y + (l_1 + EPSILON)
    # divide -> EUP reciprocal + VPU mul (approx=False keeps full accuracy)
    o_ref[...] = numer * pl.reciprocal(denom, approx=False) * y


def prepare_unsuper_weights(w1, w2, matmul_dtype=jnp.float32):
    """Hoist once per model / training step (NOT per layer call).

    nn.Linear weights: w1 (comp, comp), w2 (comp, features).
    Returns lane-padded transposed weights  W1^T -> (CP, CP),  W2^T -> (FP, CP)
    with CP = round_up(comp, 128), FP = round_up(features, 128), optionally cast
    to bf16 for MXU-native matmul on v6e/v7x (f32 is fine on all chips).
    """
    comp, features = w2.shape
    cp = _round_up(comp, _LANE)
    fp = _round_up(features, _LANE)
    w1t = jnp.zeros((cp, cp), matmul_dtype).at[:comp, :comp].set(w1.T.astype(matmul_dtype))
    w2t = jnp.zeros((fp, cp), matmul_dtype).at[:features, :comp].set(w2.T.astype(matmul_dtype))
    return w1t, w2t


def unsuper_layer(y, x, w1t_pad, w2t_pad, l_1, l_2, *, block_b=None):
    """y: (B, comp), x: (B, features); w1t_pad/w2t_pad from prepare_unsuper_weights()."""
    B, comp = y.shape
    features = x.shape[1]
    cp = w1t_pad.shape[0]
    fp = w2t_pad.shape[0]
    assert w1t_pad.shape == (cp, cp) and w2t_pad.shape == (fp, cp)
    assert cp >= comp and fp >= features

    w_itemsize = jnp.dtype(w1t_pad.dtype).itemsize

    # Per-grid-step VMEM estimate (double-buffered activations/output + resident weights).
    def step_bytes(tb):
        act = 2 * tb * (cp + fp) * 4                    # y + x input blocks (f32)
        out = 2 * tb * cp * 4                           # output block (f32)
        wts = 2 * (cp * cp + fp * cp) * w_itemsize      # weights (budget 2 buffers)
        return act + out + wts

    if block_b is None:
        # Biggest batch tile that fits a conservative budget (safe on v7x's 64 MiB VMEM).
        tb = min(512, _round_up(B, _SUBLANE))
        while tb > _SUBLANE and step_bytes(tb) > (24 << 20):
            tb = max(_SUBLANE, tb // 2)
    else:
        tb = _round_up(block_b, _SUBLANE)

    b_pad = _round_up(B, tb)
    nb = b_pad // tb

    # Lane/sublane-dense zero-padded activations. Padded rows/cols are inert:
    # numer = 0 and y = 0 there, so out = 0 and is sliced away below.
    y_pad = jnp.pad(y.astype(jnp.float32), ((0, b_pad - B), (0, cp - comp)))
    x_pad = jnp.pad(x.astype(jnp.float32), ((0, b_pad - B), (0, fp - features)))

    # l_1 / l_2 travel through SMEM so sweeping them never triggers a recompile.
    reg = jnp.asarray([l_1, l_2], dtype=jnp.float32)

    vmem_limit = int(min(48 << 20, max(16 << 20, step_bytes(tb) * 3 // 2)))
    cost = pl.CostEstimate(
        flops=2 * b_pad * cp * (cp + fp),
        transcendentals=0,
        bytes_accessed=(y_pad.size + x_pad.size + b_pad * cp) * 4
        + (w1t_pad.size + w2t_pad.size) * w_itemsize,
    )

    out_pad = pl.pallas_call(
        _unsuper_kernel,
        out_shape=jax.ShapeDtypeStruct((b_pad, cp), jnp.float32),
        grid=(nb,),
        in_specs=[
            pl.BlockSpec(memory_space=pltpu.MemorySpace.SMEM),   # (2,) [l_1, l_2]
            pl.BlockSpec((tb, cp), lambda i: (i, 0)),            # y batch block
            pl.BlockSpec((tb, fp), lambda i: (i, 0)),            # x batch block
            pl.BlockSpec((cp, cp), lambda i: (0, 0)),            # W1^T (VMEM-resident)
            pl.BlockSpec((fp, cp), lambda i: (0, 0)),            # W2^T (VMEM-resident)
        ],
        out_specs=pl.BlockSpec((tb, cp), lambda i: (i, 0)),
        compiler_params=pltpu.CompilerParams(
            dimension_semantics=("parallel",),
            vmem_limit_bytes=vmem_limit,
        ),
        cost_estimate=cost,
    )(reg, y_pad, x_pad, w1t_pad, w2t_pad)

    return out_pad[:B, :comp]


def unsuper_layer_ref(y, x, w1, w2, l_1, l_2):
    denom = y @ w1.T + l_2 * y + l_1 + EPSILON
    numer = x @ w2.T
    return (numer / denom) * y


if __name__ == "__main__":
    # Small shapes consistent with the module: comp (latent) and features dims.
    B, comp, features = 8, 32, 64
    l_1, l_2 = 0.1, 0.2

    key = jax.random.PRNGKey(0)
    k_y, k_x, k_w1, k_w2, k_y2, k_x2 = jax.random.split(key, 6)

    # y must stay positive for the multiplicative-update semantics to be sane.
    y = jax.random.uniform(k_y, (B, comp), jnp.float32, minval=0.1, maxval=1.0)
    x = jax.random.uniform(k_x, (B, features), jnp.float32, minval=0.1, maxval=1.0)

    # Deterministic synthetic weights (nn.Linear weight shapes: (out, in)).
    w1 = jax.random.uniform(k_w1, (comp, comp), jnp.float32, minval=0.0, maxval=0.5)
    w2 = jax.random.uniform(k_w2, (comp, features), jnp.float32, minval=0.0, maxval=0.5)

    # --- f32 path, single batch block -------------------------------------
    w1t_f32, w2t_f32 = prepare_unsuper_weights(w1, w2, jnp.float32)
    out = unsuper_layer(y, x, w1t_f32, w2t_f32, l_1, l_2)
    jax.block_until_ready(out)
    ref = unsuper_layer_ref(y, x, w1, w2, l_1, l_2)
    assert out.shape == (B, comp)
    assert jnp.allclose(out, ref, rtol=1e-4, atol=1e-5), "f32 mismatch vs reference"

    # --- multi-block grid path (exercises batch tiling + padding) ----------
    B2 = 300
    y2 = jax.random.uniform(k_y2, (B2, comp), jnp.float32, minval=0.1, maxval=1.0)
    x2 = jax.random.uniform(k_x2, (B2, features), jnp.float32, minval=0.1, maxval=1.0)
    out2 = unsuper_layer(y2, x2, w1t_f32, w2t_f32, l_1, l_2, block_b=128)
    jax.block_until_ready(out2)
    ref2 = unsuper_layer_ref(y2, x2, w1, w2, l_1, l_2)
    assert out2.shape == (B2, comp)
    assert jnp.allclose(out2, ref2, rtol=1e-4, atol=1e-5), "gridded f32 mismatch"

    # --- bf16-matmul path (MXU-native on v6e/v7x), f32 epilogue ------------
    w1t_bf, w2t_bf = prepare_unsuper_weights(w1, w2, jnp.bfloat16)
    out_bf = unsuper_layer(y2, x2, w1t_bf, w2t_bf, l_1, l_2, block_b=128)
    jax.block_until_ready(out_bf)
    assert jnp.allclose(out_bf, ref2, rtol=3e-2, atol=3e-2), "bf16 mismatch vs reference"

    print("KERNEL_OK")
</pallas_src>

<mosaic_0001>
module attributes {stable_mosaic.version = 11 : i64} {
  func.func @_unsuper_kernel(%arg0: i32, %arg1: memref<2xf32, #tpu.memory_space<smem>>, %arg2: memref<8x128xf32, #tpu.memory_space<vmem>>, %arg3: memref<8x128xf32, #tpu.memory_space<vmem>>, %arg4: memref<128x128xf32, #tpu.memory_space<vmem>>, %arg5: memref<128x128xf32, #tpu.memory_space<vmem>>, %arg6: memref<8x128xf32, #tpu.memory_space<vmem>>) attributes {dimension_semantics = [#tpu.dimension_semantics<parallel>], iteration_bounds = array<i64: 1>, scalar_prefetch = 0 : i64, scratch_operands = 0 : i64, tpu.core_type = #tpu.core_type<tc>, window_params = [{transform_indices = @transform_0, window_bounds = array<i64: 2>}, {transform_indices = @transform_1, window_bounds = array<i64: 8, 128>}, {transform_indices = @transform_2, window_bounds = array<i64: 8, 128>}, {pipeline_mode = #tpu.pipeline_mode<synchronous>, transform_indices = @transform_3, window_bounds = array<i64: 128, 128>}, {pipeline_mode = #tpu.pipeline_mode<synchronous>, transform_indices = @transform_4, window_bounds = array<i64: 128, 128>}, {transform_indices = @transform_5, window_bounds = array<i64: 8, 128>}]} {
    %c0 = arith.constant 0 : index
    %c0_0 = arith.constant 0 : index
    %0 = vector.load %arg2[%c0, %c0_0] : memref<8x128xf32, #tpu.memory_space<vmem>>, vector<8x128xf32>
    %c0_1 = arith.constant 0 : index
    %c0_2 = arith.constant 0 : index
    %1 = vector.load %arg3[%c0_1, %c0_2] : memref<8x128xf32, #tpu.memory_space<vmem>>, vector<8x128xf32>
    %c0_3 = arith.constant 0 : index
    %c0_4 = arith.constant 0 : index
    %2 = vector.load %arg4[%c0_3, %c0_4] : memref<128x128xf32, #tpu.memory_space<vmem>>, vector<128x128xf32>
    %cst = arith.constant dense<0.000000e+00> : vector<8x128xf32>
    %3 = tpu.matmul %0, %2, %cst {dimension_numbers = #tpu.dot_dimension_numbers<[1], [0], [0], [1], [0, 0, 1, 1], [], []>} : vector<8x128xf32>, vector<128x128xf32>, vector<8x128xf32> -> vector<8x128xf32>
    %c0_5 = arith.constant 0 : index
    %c0_6 = arith.constant 0 : index
    %4 = vector.load %arg5[%c0_5, %c0_6] : memref<128x128xf32, #tpu.memory_space<vmem>>, vector<128x128xf32>
    %cst_7 = arith.constant dense<0.000000e+00> : vector<8x128xf32>
    %5 = tpu.matmul %1, %4, %cst_7 {dimension_numbers = #tpu.dot_dimension_numbers<[1], [0], [0], [1], [0, 0, 1, 1], [], []>} : vector<8x128xf32>, vector<128x128xf32>, vector<8x128xf32> -> vector<8x128xf32>
    %c0_8 = arith.constant 0 : index
    %6 = memref.load %arg1[%c0_8] : memref<2xf32, #tpu.memory_space<smem>>
    %c1 = arith.constant 1 : index
    %7 = memref.load %arg1[%c1] : memref<2xf32, #tpu.memory_space<smem>>
    %8 = vector.broadcast %7 : f32 to vector<8x128xf32>
    %9 = arith.mulf %8, %0 : vector<8x128xf32>
    %10 = arith.addf %3, %9 : vector<8x128xf32>
    %cst_9 = arith.constant 1.1920929E-7 : f32
    %11 = arith.addf %6, %cst_9 : f32
    %12 = vector.broadcast %11 : f32 to vector<8x128xf32>
    %13 = arith.addf %10, %12 : vector<8x128xf32>
    %14 = tpu.reciprocal %13 : vector<8x128xf32> -> vector<8x128xf32>
    %15 = arith.mulf %5, %14 : vector<8x128xf32>
    %16 = arith.mulf %15, %0 : vector<8x128xf32>
    %c0_10 = arith.constant 0 : index
    %c0_11 = arith.constant 0 : index
    %17 = vector.load %arg6[%c0_10, %c0_11] : memref<8x128xf32, #tpu.memory_space<vmem>>, vector<8x128xf32>
    tpu.vector_store %arg6[%c0_10, %c0_11], %16 {strides = array<i32>} : memref<8x128xf32, #tpu.memory_space<vmem>>, vector<8x128xf32>,
    return
  }
  func.func @transform_0(%arg0: i32) -> i32 {
    %c0_i32 = arith.constant 0 : i32
    %c0_i32_0 = arith.constant 0 : i32
    return %c0_i32 : i32
  }
  func.func @transform_1(%arg0: i32) -> (i32, i32) {
    %c0_i32 = arith.constant 0 : i32
    %c0_i32_0 = arith.constant 0 : i32
    return %arg0, %c0_i32 : i32, i32
  }
  func.func @transform_2(%arg0: i32) -> (i32, i32) {
    %c0_i32 = arith.constant 0 : i32
    %c0_i32_0 = arith.constant 0 : i32
    return %arg0, %c0_i32 : i32, i32
  }
  func.func @transform_3(%arg0: i32) -> (i32, i32) {
    %c0_i32 = arith.constant 0 : i32
    %c0_i32_0 = arith.constant 0 : i32
    %c0_i32_1 = arith.constant 0 : i32
    return %c0_i32, %c0_i32_0 : i32, i32
  }
  func.func @transform_4(%arg0: i32) -> (i32, i32) {
    %c0_i32 = arith.constant 0 : i32
    %c0_i32_0 = arith.constant 0 : i32
    %c0_i32_1 = arith.constant 0 : i32
    return %c0_i32, %c0_i32_0 : i32, i32
  }
  func.func @transform_5(%arg0: i32) -> (i32, i32) {
    %c0_i32 = arith.constant 0 : i32
    %c0_i32_0 = arith.constant 0 : i32
    return %arg0, %c0_i32 : i32, i32
  }
}

</mosaic_0001>

<llo_original>
// kernel: tpu_custom_call.1
$region0: #{tpu_custom_call.1}
  #allocation0 [shape = 'u32[]', space=smem, size = 0x4, offset = 0x4, fixed_abs, tag = 'smem constant byte address 0x4 - core index']
  #allocation1 [shape = 'u32[144,128]{1,0:T(1,128)}', space=vmem, size = 0x12000, scoped, tag = 'internal scratch']
  %s0 = inlined_call_operand.hbm [shape: f32[2], index: 0, kind: input, shape index: {}]
  %s1 = inlined_call_operand.hbm [shape: f32[8,128], index: 1, kind: input, shape index: {}]
  %s2 = inlined_call_operand.hbm [shape: f32[8,128], index: 2, kind: input, shape index: {}]
  %s3 = inlined_call_operand.hbm [shape: f32[128,128], index: 3, kind: input, shape index: {}]
  %s4 = inlined_call_operand.hbm [shape: f32[128,128], index: 4, kind: input, shape index: {}]
  %s5 = inlined_call_operand.hbm [shape: f32[8,128], index: 5, kind: output, shape index: {}]
  %s6 = sld [smem:[#allocation0]]
  $region50: #{tpu_custom_call.1} parent=0
    _
  %s8 = ssub.s32 1, %s6
  %s9 = scalar_select 0, %s8, %s6
  $region1: #{tpu_custom_call.1} parent=0
    #allocation2 [shape = 'u8[512]{0}', space=smem, size = 0x200, scoped, tag = 'input window, operand 0, single buffered']
    #allocation3 [shape = 's32[1]{0}', space=sflag, size = 0x4, scoped, tag = 'scoped memory for tpu_custom_call.1']
    #allocation4 [shape = 's32[1]{0}', space=sflag, size = 0x4, scoped, tag = 'scoped memory for tpu_custom_call.1']
    #allocation5 [shape = 's32[1]{0}', space=sflag, size = 0x4, scoped, tag = 'scoped memory for tpu_custom_call.1']
    #allocation6 [shape = 'u8[4096]{0}', space=vmem, size = 0x1000, scoped, tag = 'input window, operand 1, single buffered']
    #allocation7 [shape = 'u8[4096]{0}', space=vmem, size = 0x1000, scoped, tag = 'input window, operand 2, single buffered']
    #allocation8 [shape = 's32[1]{0}', space=sflag, size = 0x4, scoped, tag = 'scoped memory for tpu_custom_call.1']
    #allocation9 [shape = 'u8[65536]{0}', space=vmem, size = 0x10000, scoped, tag = 'input window, operand 3, single buffered']
    #allocation10 [shape = 'u8[65536]{0}', space=vmem, size = 0x10000, scoped, tag = 'input window, operand 4, single buffered']
    #allocation11 [shape = 's32[1]{0}', space=sflag, size = 0x4, scoped, tag = 'scoped memory for tpu_custom_call.1']
    #allocation12 [shape = 'u8[4096]{0}', space=vmem, size = 0x1000, scoped, tag = 'output window, operand 0, single buffered']
    %10 = vsyncpa [#allocation5], 0
    %11 = vsyncpa [#allocation3], 0
    %12 = vsyncpa [#allocation8], 0
    %13 = vsyncpa [#allocation11], 0
    %14 = vsyncpa [#allocation4], 0
    // Predicated region
    $region2: #{tpu_custom_call.1} parent=1 // pred_check
      _
    $region3: #{tpu_custom_call.1} parent=1 // pred_check_branch
      %16 = sbr.rel (0) target = $region5
    $region4: #{tpu_custom_call.1} parent=1 // pred_region
      %s18 = ssub.s32 16, 16
      %19 = vsyncadd [#allocation5], %s18
      %22 = dma.hbm_to_smem %s0, 16, [#allocation2], [#allocation5]
    $region5: #{tpu_custom_call.1} parent=1 // pred_fallthru
      _
    // Predicated region
    $region6: #{tpu_custom_call.1} parent=1 // pred_check
      _
    $region7: #{tpu_custom_call.1} parent=1 // pred_check_branch
      %24 = sbr.rel (0) target = $region9
    $region8: #{tpu_custom_call.1} parent=1 // pred_region
      %s26 = ssub.s32 128, 128
      %27 = vsyncadd [#allocation3], %s26
      %s29 = sshll.u32 [#allocation6], 4
      %s30 = int_to_ptr.vmem [resolvable:$true] %s29
      %32 = dma.hbm_to_vmem [thread:$0]  %s1, 128, %s30, [#allocation3]
    $region9: #{tpu_custom_call.1} parent=1 // pred_fallthru
      _
    // Predicated region
    $region10: #{tpu_custom_call.1} parent=1 // pred_check
      _
    $region11: #{tpu_custom_call.1} parent=1 // pred_check_branch
      %34 = sbr.rel (0) target = $region13
    $region12: #{tpu_custom_call.1} parent=1 // pred_region
      %s36 = ssub.s32 128, 128
      %37 = vsyncadd [#allocation8], %s36
      %s39 = sshll.u32 [#allocation7], 4
      %s40 = int_to_ptr.vmem [resolvable:$true] %s39
      %42 = dma.hbm_to_vmem [thread:$0]  %s2, 128, %s40, [#allocation8]
    $region13: #{tpu_custom_call.1} parent=1 // pred_fallthru
      _
    // Predicated region
    $region14: #{tpu_custom_call.1} parent=1 // pred_check
      _
    $region15: #{tpu_custom_call.1} parent=1 // pred_check_branch
      %44 = sbr.rel (0) target = $region17
    $region16: #{tpu_custom_call.1} parent=1 // pred_region
      %s46 = ssub.s32 2048, 2048
      %47 = vsyncadd [#allocation8], %s46
      %s48 = sshll.u32 [#allocation9], 4
      %s49 = int_to_ptr.vmem [resolvable:$true] %s48
      %54 = dma.hbm_to_vmem [thread:$0]  %s3, 2048, %s49, [#allocation8], 128, 128, 8
    $region17: #{tpu_custom_call.1} parent=1 // pred_fallthru
      _
    // Predicated region
    $region18: #{tpu_custom_call.1} parent=1 // pred_check
      _
    $region19: #{tpu_custom_call.1} parent=1 // pred_check_branch
      %56 = sbr.rel (0) target = $region21
    $region20: #{tpu_custom_call.1} parent=1 // pred_region
      %s58 = ssub.s32 2048, 2048
      %59 = vsyncadd [#allocation11], %s58
      %s60 = sshll.u32 [#allocation10], 4
      %s61 = int_to_ptr.vmem [resolvable:$true] %s60
      %66 = dma.hbm_to_vmem [thread:$0]  %s4, 2048, %s61, [#allocation11], 128, 128, 8
    $region21: #{tpu_custom_call.1} parent=1 // pred_fallthru
      _
    // Predicated region
    $region22: #{tpu_custom_call.1} parent=1 // pred_check
      _
    $region23: #{tpu_custom_call.1} parent=1 // pred_check_branch
      %68 = sbr.rel (0) target = $region25
    $region24: #{tpu_custom_call.1} parent=1 // pred_region
      %69 = dma.done [#allocation5], 16
    $region25: #{tpu_custom_call.1} parent=1 // pred_fallthru
      _
    // Predicated region
    $region26: #{tpu_custom_call.1} parent=1 // pred_check
      _
    $region27: #{tpu_custom_call.1} parent=1 // pred_check_branch
      %71 = sbr.rel (0) target = $region29
    $region28: #{tpu_custom_call.1} parent=1 // pred_region
      %72 = dma.done [#allocation3], 128
    $region29: #{tpu_custom_call.1} parent=1 // pred_fallthru
      _
    // Predicated region
    $region30: #{tpu_custom_call.1} parent=1 // pred_check
      _
    $region31: #{tpu_custom_call.1} parent=1 // pred_check_branch
      %74 = sbr.rel (0) target = $region33
    $region32: #{tpu_custom_call.1} parent=1 // pred_region
      %75 = dma.done [#allocation8], 128
    $region33: #{tpu_custom_call.1} parent=1 // pred_fallthru
      _
    // Predicated region
    $region34: #{tpu_custom_call.1} parent=1 // pred_check
      _
    $region35: #{tpu_custom_call.1} parent=1 // pred_check_branch
      %77 = sbr.rel (0) target = $region37
    $region36: #{tpu_custom_call.1} parent=1 // pred_region
      %78 = dma.done [#allocation8], 2048
    $region37: #{tpu_custom_call.1} parent=1 // pred_fallthru
      _
    // Predicated region
    $region38: #{tpu_custom_call.1} parent=1 // pred_check
      _
    $region39: #{tpu_custom_call.1} parent=1 // pred_check_branch
      %80 = sbr.rel (0) target = $region41
    $region40: #{tpu_custom_call.1} parent=1 // pred_region
      %81 = dma.done [#allocation11], 2048
    $region41: #{tpu_custom_call.1} parent=1 // pred_fallthru
      _
    %82 = sfence
    %v83 = vld [vmem:[#allocation6] sm:$0xff]
    %v84 = vld [vmem:[#allocation7] sm:$0xff]
    %v85 = vld [vmem:[#allocation9] sm:$0xff]
    %v86 = vld [vmem:[#allocation9 + $0x8] sm:$0xff]
    %v87 = vld [vmem:[#allocation9 + $0x10] sm:$0xff]
    %v88 = vld [vmem:[#allocation9 + $0x18] sm:$0xff]
    %v89 = vld [vmem:[#allocation9 + $0x20] sm:$0xff]
    %v90 = vld [vmem:[#allocation9 + $0x28] sm:$0xff]
    %v91 = vld [vmem:[#allocation9 + $0x30] sm:$0xff]
    %v92 = vld [vmem:[#allocation9 + $0x38] sm:$0xff]
    %v93 = vld [vmem:[#allocation9 + $0x40] sm:$0xff]
    %v94 = vld [vmem:[#allocation9 + $0x48] sm:$0xff]
    %v95 = vld [vmem:[#allocation9 + $0x50] sm:$0xff]
    %v96 = vld [vmem:[#allocation9 + $0x58] sm:$0xff]
    %v97 = vld [vmem:[#allocation9 + $0x60] sm:$0xff]
    %v98 = vld [vmem:[#allocation9 + $0x68] sm:$0xff]
    %v99 = vld [vmem:[#allocation9 + $0x70] sm:$0xff]
    %v100 = vld [vmem:[#allocation9 + $0x78] sm:$0xff]
    %v101 = vld [vmem:[#allocation10] sm:$0xff]
    %v102 = vld [vmem:[#allocation10 + $0x8] sm:$0xff]
    %v103 = vld [vmem:[#allocation10 + $0x10] sm:$0xff]
    %v104 = vld [vmem:[#allocation10 + $0x18] sm:$0xff]
    %v105 = vld [vmem:[#allocation10 + $0x20] sm:$0xff]
    %v106 = vld [vmem:[#allocation10 + $0x28] sm:$0xff]
    %v107 = vld [vmem:[#allocation10 + $0x30] sm:$0xff]
    %v108 = vld [vmem:[#allocation10 + $0x38] sm:$0xff]
    %v109 = vld [vmem:[#allocation10 + $0x40] sm:$0xff]
    %v110 = vld [vmem:[#allocation10 + $0x48] sm:$0xff]
    %v111 = vld [vmem:[#allocation10 + $0x50] sm:$0xff]
    %v112 = vld [vmem:[#allocation10 + $0x58] sm:$0xff]
    %v113 = vld [vmem:[#allocation10 + $0x60] sm:$0xff]
    %v114 = vld [vmem:[#allocation10 + $0x68] sm:$0xff]
    %v115 = vld [vmem:[#allocation10 + $0x70] sm:$0xff]
    %v116 = vld [vmem:[#allocation10 + $0x78] sm:$0xff]
    %117 = vmatprep.subr.mxu0 0.0
    %118 = vmatpush1.msra.mxu0 %v101
    %119 = vmatprep.subr.mxu0 0.0
    %120 = vmatpush1.msra.mxu0 %v102
    %121 = vmatprep.subr.mxu0 0.0
    %122 = vmatpush1.msra.mxu0 %v103
    %123 = vmatprep.subr.mxu0 0.0
    %124 = vmatpush1.msra.mxu0 %v104
    %125 = vmatprep.subr.mxu0 0.0
    %126 = vmatpush1.msra.mxu0 %v105
    %127 = vmatprep.subr.mxu0 0.0
    %128 = vmatpush1.msra.mxu0 %v106
    %129 = vmatprep.subr.mxu0 0.0
    %130 = vmatpush1.msra.mxu0 %v107
    %131 = vmatprep.subr.mxu0 0.0
    %132 = vmatpush1.msra.mxu0 %v108
    %133 = vmatprep.subr.mxu0 0.0
    %134 = vmatpush1.msra.mxu0 %v109
    %135 = vmatprep.subr.mxu0 0.0
    %136 = vmatpush1.msra.mxu0 %v110
    %137 = vmatprep.subr.mxu0 0.0
    %138 = vmatpush1.msra.mxu0 %v111
    %139 = vmatprep.subr.mxu0 0.0
    %140 = vmatpush1.msra.mxu0 %v112
    %141 = vmatprep.subr.mxu0 0.0
    %142 = vmatpush1.msra.mxu0 %v113
    %143 = vmatprep.subr.mxu0 0.0
    %144 = vmatpush1.msra.mxu0 %v114
    %145 = vmatprep.subr.mxu0 0.0
    %146 = vmatpush1.msra.mxu0 %v115
    %147 = vmatprep.subr.mxu0 0.0
    %148 = vmatpush1.msra.mxu0 %v116
    %149 = vmatprep.subr.mxu0 0.0
    %150 = vmatpush1.msra.mxu0 0.0
    %151 = vmatprep.subr.mxu0 0.0
    %152 = vmatpush1.msra.mxu0 0.0
    %153 = vmatprep.subr.mxu0 0.0
    %154 = vmatpush1.msra.mxu0 0.0
    %155 = vmatprep.subr.mxu0 0.0
    %156 = vmatpush1.msra.mxu0 0.0
    %157 = vmatprep.subr.mxu0 0.0
    %158 = vmatpush1.msra.mxu0 0.0
    %159 = vmatprep.subr.mxu0 0.0
    %160 = vmatpush1.msra.mxu0 0.0
    %161 = vmatprep.subr.mxu0 0.0
    %162 = vmatpush1.msra.mxu0 0.0
    %163 = vmatprep.subr.mxu0 0.0
    %164 = vmatpush1.msra.mxu0 0.0
    %165 = vmatprep.subr.mxu0 0.0
    %166 = vmatpush1.msra.mxu0 0.0
    %167 = vmatprep.subr.mxu0 0.0
    %168 = vmatpush1.msra.mxu0 0.0
    %169 = vmatprep.subr.mxu0 0.0
    %170 = vmatpush1.msra.mxu0 0.0
    %171 = vmatprep.subr.mxu0 0.0
    %172 = vmatpush1.msra.mxu0 0.0
    %173 = vmatprep.subr.mxu0 0.0
    %174 = vmatpush1.msra.mxu0 0.0
    %175 = vmatprep.subr.mxu0 0.0
    %176 = vmatpush1.msra.mxu0 0.0
    %177 = vmatprep.subr.mxu0 0.0
    %178 = vmatpush1.msra.mxu0 0.0
    %179 = vmatprep.subr.mxu0 0.0
    %180 = vmatpush1.msra.mxu0 0.0
    %181 = vmatprep.mubr.f32.mxu0 0.0
    %182 = vmatmul.mubr.f32.gmra.mrb[0].mxu0 %v84
    %v183 = vpop.f32.mrb[0].mxu0
    %v184 = vadd.f32 0.0, %v183
    %v185 = vpop.f32.mrb[0].mxu0
    %186 = vdwg.mxu0
    %s187 = sld [smem:[#allocation2]]
    %s188 = sld [smem:[#allocation2 + $0x1]]
    %v189 = vstv %s188
    %v190 = vmul.f32 %v189, %v83
    %191 = vmatprep.subr.mxu0 0.0
    %192 = vmatpush1.msra.mxu0 %v85
    %193 = vmatprep.subr.mxu0 0.0
    %194 = vmatpush1.msra.mxu0 %v86
    %195 = vmatprep.subr.mxu0 0.0
    %196 = vmatpush1.msra.mxu0 %v87
    %197 = vmatprep.subr.mxu0 0.0
    %198 = vmatpush1.msra.mxu0 %v88
    %199 = vmatprep.subr.mxu0 0.0
    %200 = vmatpush1.msra.mxu0 %v89
    %201 = vmatprep.subr.mxu0 0.0
    %202 = vmatpush1.msra.mxu0 %v90
    %203 = vmatprep.subr.mxu0 0.0
    %204 = vmatpush1.msra.mxu0 %v91
    %205 = vmatprep.subr.mxu0 0.0
    %206 = vmatpush1.msra.mxu0 %v92
    %207 = vmatprep.subr.mxu0 0.0
    %208 = vmatpush1.msra.mxu0 %v93
    %209 = vmatprep.subr.mxu0 0.0
    %210 = vmatpush1.msra.mxu0 %v94
    %211 = vmatprep.subr.mxu0 0.0
    %212 = vmatpush1.msra.mxu0 %v95
    %213 = vmatprep.subr.mxu0 0.0
    %214 = vmatpush1.msra.mxu0 %v96
    %215 = vmatprep.subr.mxu0 0.0
    %216 = vmatpush1.msra.mxu0 %v97
    %217 = vmatprep.subr.mxu0 0.0
    %218 = vmatpush1.msra.mxu0 %v98
    %219 = vmatprep.subr.mxu0 0.0
    %220 = vmatpush1.msra.mxu0 %v99
    %221 = vmatprep.subr.mxu0 0.0
    %222 = vmatpush1.msra.mxu0 %v100
    %223 = vmatprep.subr.mxu0 0.0
    %224 = vmatpush1.msra.mxu0 0.0
    %225 = vmatprep.subr.mxu0 0.0
    %226 = vmatpush1.msra.mxu0 0.0
    %227 = vmatprep.subr.mxu0 0.0
    %228 = vmatpush1.msra.mxu0 0.0
    %229 = vmatprep.subr.mxu0 0.0
    %230 = vmatpush1.msra.mxu0 0.0
    %231 = vmatprep.subr.mxu0 0.0
    %232 = vmatpush1.msra.mxu0 0.0
    %233 = vmatprep.subr.mxu0 0.0
    %234 = vmatpush1.msra.mxu0 0.0
    %235 = vmatprep.subr.mxu0 0.0
    %236 = vmatpush1.msra.mxu0 0.0
    %237 = vmatprep.subr.mxu0 0.0
    %238 = vmatpush1.msra.mxu0 0.0
    %239 = vmatprep.subr.mxu0 0.0
    %240 = vmatpush1.msra.mxu0 0.0
    %241 = vmatprep.subr.mxu0 0.0
    %242 = vmatpush1.msra.mxu0 0.0
    %243 = vmatprep.subr.mxu0 0.0
    %244 = vmatpush1.msra.mxu0 0.0
    %245 = vmatprep.subr.mxu0 0.0
    %246 = vmatpush1.msra.mxu0 0.0
    %247 = vmatprep.subr.mxu0 0.0
    %248 = vmatpush1.msra.mxu0 0.0
    %249 = vmatprep.subr.mxu0 0.0
    %250 = vmatpush1.msra.mxu0 0.0
    %251 = vmatprep.subr.mxu0 0.0
    %252 = vmatpush1.msra.mxu0 0.0
    %253 = vmatprep.subr.mxu0 0.0
    %254 = vmatpush1.msra.mxu0 0.0
    %255 = vmatprep.mubr.f32.mxu0 0.0
    %256 = vmatmul.mubr.f32.gmra.mrb[0].mxu0 %v83
    %v257 = vpop.f32.mrb[0].mxu0
    %v258 = vadd.f32 %v190, %v257
    %v259 = vpop.f32.mrb[0].mxu0
    %260 = vdwg.mxu0
    %s261 = sadd.f32 %s187, 1.1920929e-07
    %v262 = vstv %s261
    %v263 = vadd.f32 %v258, %v262
    %v264 = vrcp.pop %v263
    %v265 = vmul.f32 %v184, %v264
    %v266 = vmul.f32 %v265, %v83
    %267 = vst [vmem:[#allocation12] sm:$0xff] %v266
    // Predicated region
    $region42: #{tpu_custom_call.1} parent=1 // pred_check
      _
    $region43: #{tpu_custom_call.1} parent=1 // pred_check_branch
      %269 = sbr.rel (0) target = $region45
    $region44: #{tpu_custom_call.1} parent=1 // pred_region
      %s271 = ssub.s32 128, 128
      %272 = vsyncadd [#allocation4], %s271
      %s274 = sshll.u32 [#allocation12], 4
      %s275 = int_to_ptr.vmem [resolvable:$true] %s274
      %277 = dma.vmem_to_hbm [thread:$0]  %s275, 128, %s5, [#allocation4]
    $region45: #{tpu_custom_call.1} parent=1 // pred_fallthru
      _
    // Predicated region
    $region46: #{tpu_custom_call.1} parent=1 // pred_check
      _
    $region47: #{tpu_custom_call.1} parent=1 // pred_check_branch
      %279 = sbr.rel (0) target = $region49
    $region48: #{tpu_custom_call.1} parent=1 // pred_region
      %280 = dma.done [#allocation4], 128
    $region49: #{tpu_custom_call.1} parent=1 // pred_fallthru
      _
    %281 = vsyncpa [#allocation3], 1
    %282 = vsyncpa [#allocation8], 1
    %283 = vsyncpa [#allocation11], 1
    %284 = vsyncpa [#allocation4], 1
    %285 = vsyncpa [#allocation5], 1

</llo_original>
